<compile_context>
chip_gen: v7x
topology: tpu7x:2x2x1
jax: 0.10.0
libtpu: 0.0.40
codegen_flags: <defaults>
</compile_context>

<pallas_src>
import jax
import jax.numpy as jnp
import numpy as np
from jax.experimental import pallas as pl
from jax.experimental.pallas import tpu as pltpu


def _round_up(n: int, m: int) -> int:
    return ((n + m - 1) // m) * m


def _make_prober_kernel(n_layers: int):
    """Kernel factory: refs = [x, w1, b1, ..., wn, bn, out]."""

    def kernel(*refs):
        x_ref = refs[0]
        o_ref = refs[1 + 2 * n_layers]
        h = x_ref[...]
        for li in range(n_layers):
            w_ref = refs[1 + 2 * li]
            b_ref = refs[2 + 2 * li]
            # Cast activations to the (bf16) compute dtype in-kernel; MXU
            # accumulates in f32, bias add / ReLU stay in f32.
            h = jnp.dot(h.astype(w_ref.dtype), w_ref[...],
                        preferred_element_type=jnp.float32)
            h = h + b_ref[...]
            if li < n_layers - 1:
                h = jnp.maximum(h, 0.0)
        o_ref[...] = h.astype(o_ref.dtype)

    return kernel


def prober_forward(x, params, *, tile_b=None, compute_dtype=jnp.bfloat16,
                   sublane=8):
    """Fused MLP forward.

    x: [B, E]. params: ((w1,b1), ..., (wn,bn)) with w: [in,out], b: [1,out].
    compute_dtype: dtype of x/weights fed to the MXU (bf16 by default: native
    MXU rate on v5e, halved weight traffic everywhere); accumulation and the
    bias/ReLU epilogue stay f32 regardless.
    """
    n_layers = len(params)
    B, E = x.shape
    dims = [E] + [int(w.shape[1]) for (w, _) in params]
    D = dims[-1]
    out_dtype = x.dtype
    compute_dtype = jnp.dtype(compute_dtype)

    # --- batch tiling: big tiles amortize the ~0.35us/step overhead ---
    if tile_b is None:
        tile_b = min(_round_up(B, sublane), 2048)
    tile_b = max(sublane, _round_up(int(tile_b), sublane))
    grid_len = pl.cdiv(B, tile_b)
    # v7x has 2 TensorCores: make sure the "parallel" grid has >= 2 steps
    # whenever the batch is large enough to split.
    if grid_len == 1 and B >= 2 * sublane:
        tile_b = _round_up(pl.cdiv(B, 2), sublane)
        grid_len = pl.cdiv(B, tile_b)

    # Weights -> compute dtype (tiny, one-time cast); biases stay f32.
    wbs = []
    for (w, b) in params:
        wbs.append((jnp.asarray(w).astype(compute_dtype),
                    jnp.asarray(b).astype(jnp.float32).reshape(1, -1)))

    # --- VMEM budget: 2x-buffered I/O tiles + 2x weights + f32 scratch ---
    x_item = jnp.dtype(x.dtype).itemsize
    o_item = jnp.dtype(out_dtype).itemsize
    w_item = compute_dtype.itemsize
    weight_bytes = sum(w.size * w_item + b.size * 4 for (w, b) in wbs)
    io_bytes = tile_b * (E * x_item + D * o_item)
    act_bytes = tile_b * sum(dims[1:]) * 4            # f32 intermediates
    need = 2 * weight_bytes + 2 * io_bytes + act_bytes + (4 << 20)
    try:
        vmem_cap = int(pltpu.get_tpu_info().vmem_capacity_bytes)
    except Exception:
        vmem_cap = 64 << 20                           # v7x-safe fallback
    vmem_limit = int(min(max(need, 16 << 20), int(vmem_cap * 0.85)))

    # --- cost estimate with true (un-padded) dims ---
    flops = 2 * B * sum(dims[i] * dims[i + 1] for i in range(n_layers))
    bytes_accessed = B * E * x_item + weight_bytes + B * D * o_item
    cost = pl.CostEstimate(flops=flops, transcendentals=0,
                           bytes_accessed=bytes_accessed)

    # --- BlockSpecs: x/out tiled over batch, weights/biases resident ---
    in_specs = [pl.BlockSpec((tile_b, E), lambda i: (i, 0))]
    for (w, _) in wbs:
        fi, fo = int(w.shape[0]), int(w.shape[1])
        in_specs.append(pl.BlockSpec((fi, fo), lambda i: (0, 0)))
        in_specs.append(pl.BlockSpec((1, fo), lambda i: (0, 0)))
    out_spec = pl.BlockSpec((tile_b, D), lambda i: (i, 0))

    flat_args = [x]
    for (w, b) in wbs:
        flat_args.extend((w, b))

    return pl.pallas_call(
        _make_prober_kernel(n_layers),
        out_shape=jax.ShapeDtypeStruct((B, D), out_dtype),
        grid_spec=pltpu.PrefetchScalarGridSpec(
            num_scalar_prefetch=0,
            grid=(grid_len,),
            in_specs=in_specs,
            out_specs=out_spec,
        ),
        compiler_params=pltpu.CompilerParams(
            dimension_semantics=("parallel",),
            vmem_limit_bytes=vmem_limit,
        ),
        cost_estimate=cost,
    )(*flat_args)


def init_prober_params(key, embedding, arch, output_shape):
    """Deterministic init mirroring nn.Linear's U(-1/sqrt(in), 1/sqrt(in))."""
    output_dim = int(np.prod(output_shape))
    arch_list = list(map(int, arch.split("-"))) if arch != "" else []
    f = [int(embedding)] + arch_list + [output_dim]
    params = []
    for i in range(len(f) - 1):
        fan_in, fan_out = f[i], f[i + 1]
        key, kw, kb = jax.random.split(key, 3)
        bound = 1.0 / np.sqrt(fan_in)
        w = jax.random.uniform(kw, (fan_in, fan_out), jnp.float32, -bound, bound)
        b = jax.random.uniform(kb, (1, fan_out), jnp.float32, -bound, bound)
        params.append((w, b))
    return tuple(params)


def prober_reference(x, params):
    h = x
    n = len(params)
    for li, (w, b) in enumerate(params):
        h = h @ w + b
        if li < n - 1:
            h = jnp.maximum(h, 0.0)
    return h


if __name__ == "__main__":
    # Prober(embedding=32, arch="64-32", output_shape=[2, 2]) -> output_dim=4
    embedding = 32
    arch = "64-32"
    output_shape = [2, 2]
    batch = 8

    key = jax.random.PRNGKey(0)
    key, kx = jax.random.split(key)
    x = jax.random.normal(kx, (batch, embedding), jnp.float32)

    params = init_prober_params(key, embedding, arch, output_shape)

    # Default bf16 compute path (f32 accumulation); tolerances are loosened
    # accordingly.  Pass compute_dtype=jnp.float32 for an exact-match check.
    out = prober_forward(x, params)
    out = jax.block_until_ready(out)

    ref = prober_reference(x, params)
    np.testing.assert_allclose(np.asarray(out), np.asarray(ref),
                               rtol=2e-2, atol=2e-2)

    print("KERNEL_OK")
</pallas_src>

<mosaic_0001>
module attributes {stable_mosaic.version = 11 : i64} {
  func.func @kernel(%arg0: i32, %arg1: memref<8x32xf32, #tpu.memory_space<vmem>>, %arg2: memref<32x64xbf16, #tpu.memory_space<vmem>>, %arg3: memref<1x64xf32, #tpu.memory_space<vmem>>, %arg4: memref<64x32xbf16, #tpu.memory_space<vmem>>, %arg5: memref<1x32xf32, #tpu.memory_space<vmem>>, %arg6: memref<32x4xbf16, #tpu.memory_space<vmem>>, %arg7: memref<1x4xf32, #tpu.memory_space<vmem>>, %arg8: memref<8x4xf32, #tpu.memory_space<vmem>>) attributes {dimension_semantics = [#tpu.dimension_semantics<parallel>], iteration_bounds = array<i64: 1>, scalar_prefetch = 0 : i64, scratch_operands = 0 : i64, tpu.core_type = #tpu.core_type<tc>, window_params = [{transform_indices = @transform_0, window_bounds = array<i64: 8, 32>}, {pipeline_mode = #tpu.pipeline_mode<synchronous>, transform_indices = @transform_1, window_bounds = array<i64: 32, 64>}, {pipeline_mode = #tpu.pipeline_mode<synchronous>, transform_indices = @transform_2, window_bounds = array<i64: 1, 64>}, {pipeline_mode = #tpu.pipeline_mode<synchronous>, transform_indices = @transform_3, window_bounds = array<i64: 64, 32>}, {pipeline_mode = #tpu.pipeline_mode<synchronous>, transform_indices = @transform_4, window_bounds = array<i64: 1, 32>}, {pipeline_mode = #tpu.pipeline_mode<synchronous>, transform_indices = @transform_5, window_bounds = array<i64: 32, 4>}, {pipeline_mode = #tpu.pipeline_mode<synchronous>, transform_indices = @transform_6, window_bounds = array<i64: 1, 4>}, {transform_indices = @transform_7, window_bounds = array<i64: 8, 4>}]} {
    %c0 = arith.constant 0 : index
    %c0_0 = arith.constant 0 : index
    %0 = vector.load %arg1[%c0, %c0_0] : memref<8x32xf32, #tpu.memory_space<vmem>>, vector<8x32xf32>
    %1 = arith.truncf %0 : vector<8x32xf32> to vector<8x32xbf16>
    %c0_1 = arith.constant 0 : index
    %c0_2 = arith.constant 0 : index
    %2 = vector.load %arg2[%c0_1, %c0_2] : memref<32x64xbf16, #tpu.memory_space<vmem>>, vector<32x64xbf16>
    %cst = arith.constant dense<0.000000e+00> : vector<8x64xf32>
    %3 = tpu.matmul %1, %2, %cst {dimension_numbers = #tpu.dot_dimension_numbers<[1], [0], [0], [1], [0, 0, 1, 1], [], []>} : vector<8x32xbf16>, vector<32x64xbf16>, vector<8x64xf32> -> vector<8x64xf32>
    %c0_3 = arith.constant 0 : index
    %c0_4 = arith.constant 0 : index
    %4 = vector.load %arg3[%c0_3, %c0_4] : memref<1x64xf32, #tpu.memory_space<vmem>>, vector<1x64xf32>
    %5 = vector.broadcast %4 : vector<1x64xf32> to vector<8x64xf32>
    %6 = arith.addf %3, %5 : vector<8x64xf32>
    %cst_5 = arith.constant 0.000000e+00 : f32
    %7 = vector.broadcast %cst_5 : f32 to vector<8x64xf32>
    %8 = arith.maximumf %6, %7 : vector<8x64xf32>
    %9 = arith.truncf %8 : vector<8x64xf32> to vector<8x64xbf16>
    %c0_6 = arith.constant 0 : index
    %c0_7 = arith.constant 0 : index
    %10 = vector.load %arg4[%c0_6, %c0_7] : memref<64x32xbf16, #tpu.memory_space<vmem>>, vector<64x32xbf16>
    %cst_8 = arith.constant dense<0.000000e+00> : vector<8x32xf32>
    %11 = tpu.matmul %9, %10, %cst_8 {dimension_numbers = #tpu.dot_dimension_numbers<[1], [0], [0], [1], [0, 0, 1, 1], [], []>} : vector<8x64xbf16>, vector<64x32xbf16>, vector<8x32xf32> -> vector<8x32xf32>
    %c0_9 = arith.constant 0 : index
    %c0_10 = arith.constant 0 : index
    %12 = vector.load %arg5[%c0_9, %c0_10] : memref<1x32xf32, #tpu.memory_space<vmem>>, vector<1x32xf32>
    %13 = vector.broadcast %12 : vector<1x32xf32> to vector<8x32xf32>
    %14 = arith.addf %11, %13 : vector<8x32xf32>
    %cst_11 = arith.constant 0.000000e+00 : f32
    %15 = vector.broadcast %cst_11 : f32 to vector<8x32xf32>
    %16 = arith.maximumf %14, %15 : vector<8x32xf32>
    %17 = arith.truncf %16 : vector<8x32xf32> to vector<8x32xbf16>
    %c0_12 = arith.constant 0 : index
    %c0_13 = arith.constant 0 : index
    %18 = vector.load %arg6[%c0_12, %c0_13] : memref<32x4xbf16, #tpu.memory_space<vmem>>, vector<32x4xbf16>
    %cst_14 = arith.constant dense<0.000000e+00> : vector<8x4xf32>
    %19 = tpu.matmul %17, %18, %cst_14 {dimension_numbers = #tpu.dot_dimension_numbers<[1], [0], [0], [1], [0, 0, 1, 1], [], []>} : vector<8x32xbf16>, vector<32x4xbf16>, vector<8x4xf32> -> vector<8x4xf32>
    %c0_15 = arith.constant 0 : index
    %c0_16 = arith.constant 0 : index
    %20 = vector.load %arg7[%c0_15, %c0_16] : memref<1x4xf32, #tpu.memory_space<vmem>>, vector<1x4xf32>
    %21 = vector.broadcast %20 : vector<1x4xf32> to vector<8x4xf32>
    %22 = arith.addf %19, %21 : vector<8x4xf32>
    %c0_17 = arith.constant 0 : index
    %c0_18 = arith.constant 0 : index
    %23 = vector.load %arg8[%c0_17, %c0_18] : memref<8x4xf32, #tpu.memory_space<vmem>>, vector<8x4xf32>
    tpu.vector_store %arg8[%c0_17, %c0_18], %22 {strides = array<i32>} : memref<8x4xf32, #tpu.memory_space<vmem>>, vector<8x4xf32>,
    return
  }
  func.func @transform_0(%arg0: i32) -> (i32, i32) {
    %c0_i32 = arith.constant 0 : i32
    %c0_i32_0 = arith.constant 0 : i32
    return %arg0, %c0_i32 : i32, i32
  }
  func.func @transform_1(%arg0: i32) -> (i32, i32) {
    %c0_i32 = arith.constant 0 : i32
    %c0_i32_0 = arith.constant 0 : i32
    %c0_i32_1 = arith.constant 0 : i32
    return %c0_i32, %c0_i32_0 : i32, i32
  }
  func.func @transform_2(%arg0: i32) -> (i32, i32) {
    %c0_i32 = arith.constant 0 : i32
    %c0_i32_0 = arith.constant 0 : i32
    %c0_i32_1 = arith.constant 0 : i32
    return %c0_i32, %c0_i32_0 : i32, i32
  }
  func.func @transform_3(%arg0: i32) -> (i32, i32) {
    %c0_i32 = arith.constant 0 : i32
    %c0_i32_0 = arith.constant 0 : i32
    %c0_i32_1 = arith.constant 0 : i32
    return %c0_i32, %c0_i32_0 : i32, i32
  }
  func.func @transform_4(%arg0: i32) -> (i32, i32) {
    %c0_i32 = arith.constant 0 : i32
    %c0_i32_0 = arith.constant 0 : i32
    %c0_i32_1 = arith.constant 0 : i32
    return %c0_i32, %c0_i32_0 : i32, i32
  }
  func.func @transform_5(%arg0: i32) -> (i32, i32) {
    %c0_i32 = arith.constant 0 : i32
    %c0_i32_0 = arith.constant 0 : i32
    %c0_i32_1 = arith.constant 0 : i32
    return %c0_i32, %c0_i32_0 : i32, i32
  }
  func.func @transform_6(%arg0: i32) -> (i32, i32) {
    %c0_i32 = arith.constant 0 : i32
    %c0_i32_0 = arith.constant 0 : i32
    %c0_i32_1 = arith.constant 0 : i32
    return %c0_i32, %c0_i32_0 : i32, i32
  }
  func.func @transform_7(%arg0: i32) -> (i32, i32) {
    %c0_i32 = arith.constant 0 : i32
    %c0_i32_0 = arith.constant 0 : i32
    return %arg0, %c0_i32 : i32, i32
  }
}

</mosaic_0001>

<llo_original>
// kernel: tpu_custom_call.1
$region0: #{tpu_custom_call.1}
  #allocation0 [shape = 'u32[]', space=smem, size = 0x4, offset = 0x4, fixed_abs, tag = 'smem constant byte address 0x4 - core index']
  #allocation1 [shape = 'u32[144,128]{1,0:T(1,128)}', space=vmem, size = 0x12000, scoped, tag = 'internal scratch']
  %s0 = inlined_call_operand.vmem [shape: f32[8,32], index: 0, kind: input, shape index: {}]
  %s1 = inlined_call_operand.vmem [shape: bf16[32,64], index: 1, kind: input, shape index: {}]
  %s2 = inlined_call_operand.vmem [shape: f32[1,64], index: 2, kind: input, shape index: {}]
  %s3 = inlined_call_operand.vmem [shape: bf16[64,32], index: 3, kind: input, shape index: {}]
  %s4 = inlined_call_operand.vmem [shape: f32[1,32], index: 4, kind: input, shape index: {}]
  %s5 = inlined_call_operand.vmem [shape: bf16[32,4], index: 5, kind: input, shape index: {}]
  %s6 = inlined_call_operand.vmem [shape: f32[1,4], index: 6, kind: input, shape index: {}]
  %s7 = inlined_call_operand.vmem [shape: f32[8,4], index: 7, kind: output, shape index: {}]
  %s8 = sld [smem:[#allocation0]]
  $region38: #{tpu_custom_call.1} parent=0
    _
  %s10 = ssub.s32 1, %s8
  %s11 = scalar_select 0, %s10, %s8
  // Predicated region
  $region2: #{tpu_custom_call.1} parent=0 // pred_check
    _
  $region3: #{tpu_custom_call.1} parent=0 // pred_check_branch
    %13 = sbr.rel (0) target = $region5
  $region4: #{tpu_custom_call.1} parent=0 // pred_region
    _
  $region5: #{tpu_custom_call.1} parent=0 // pred_fallthru
    _
  // Predicated region
  $region6: #{tpu_custom_call.1} parent=0 // pred_check
    _
  $region7: #{tpu_custom_call.1} parent=0 // pred_check_branch
    %15 = sbr.rel (0) target = $region9
  $region8: #{tpu_custom_call.1} parent=0 // pred_region
    _
  $region9: #{tpu_custom_call.1} parent=0 // pred_fallthru
    _
  // Predicated region
  $region10: #{tpu_custom_call.1} parent=0 // pred_check
    _
  $region11: #{tpu_custom_call.1} parent=0 // pred_check_branch
    %17 = sbr.rel (0) target = $region13
  $region12: #{tpu_custom_call.1} parent=0 // pred_region
    _
  $region13: #{tpu_custom_call.1} parent=0 // pred_fallthru
    _
  // Predicated region
  $region14: #{tpu_custom_call.1} parent=0 // pred_check
    _
  $region15: #{tpu_custom_call.1} parent=0 // pred_check_branch
    %19 = sbr.rel (0) target = $region17
  $region16: #{tpu_custom_call.1} parent=0 // pred_region
    _
  $region17: #{tpu_custom_call.1} parent=0 // pred_fallthru
    _
  // Predicated region
  $region18: #{tpu_custom_call.1} parent=0 // pred_check
    _
  $region19: #{tpu_custom_call.1} parent=0 // pred_check_branch
    %21 = sbr.rel (0) target = $region21
  $region20: #{tpu_custom_call.1} parent=0 // pred_region
    _
  $region21: #{tpu_custom_call.1} parent=0 // pred_fallthru
    _
  // Predicated region
  $region22: #{tpu_custom_call.1} parent=0 // pred_check
    _
  $region23: #{tpu_custom_call.1} parent=0 // pred_check_branch
    %23 = sbr.rel (0) target = $region25
  $region24: #{tpu_custom_call.1} parent=0 // pred_region
    _
  $region25: #{tpu_custom_call.1} parent=0 // pred_fallthru
    _
  // Predicated region
  $region26: #{tpu_custom_call.1} parent=0 // pred_check
    _
  $region27: #{tpu_custom_call.1} parent=0 // pred_check_branch
    %25 = sbr.rel (0) target = $region29
  $region28: #{tpu_custom_call.1} parent=0 // pred_region
    _
  $region29: #{tpu_custom_call.1} parent=0 // pred_fallthru
    _
  %v27 = vld [vmem:[%s0] sm:$0xff]
  %v28 = vpack.c.bf16 %v27, %v27
  %v29 = vld [vmem:[%s1] sm:$0xf]
  %v30 = vld [vmem:[%s1 + $0x4] sm:$0xf]
  %v31 = vld [vmem:[%s1 + $0x8] sm:$0xf]
  %v32 = vld [vmem:[%s1 + $0xc] sm:$0xf]
  %v33 = vld [vmem:[%s2] sm:$0x1]
  %v35 = vlaneseq
  %v36 = vshrl.u32 %v35, 7
  %v37 = vsub.s32 0, %v36
  %v38 = vrot.slane %v33, %v37
  %v44 = vunpack.c.l.b16 %v29
  %v45 = vunpack.c.l.b16 %v30
  %v46 = vunpack.c.l.b16 %v31
  %v47 = vunpack.c.l.b16 %v32
  %v48 = vpack.c.b16 %v45, %v44
  %v49 = vpack.c.b16 %v47, %v46
  %vm52 = vcmask 261120
  %v54 = vsel %vm52, %v28, 0
  %56 = vmatprep.subr.bf16.mxu0 0
  %57 = vmatpush1.bf16.msra.mxu0 %v48
  %58 = vmatprep.subr.bf16.mxu0 0
  %59 = vmatpush1.bf16.msra.mxu0 %v49
  %60 = vmatprep.subr.bf16.mxu0 0
  %61 = vmatpush1.bf16.msra.mxu0 0
  %62 = vmatprep.subr.bf16.mxu0 0
  %63 = vmatpush1.bf16.msra.mxu0 0
  %64 = vmatprep.subr.bf16.mxu0 0
  %65 = vmatpush1.bf16.msra.mxu0 0
  %66 = vmatprep.subr.bf16.mxu0 0
  %67 = vmatpush1.bf16.msra.mxu0 0
  %68 = vmatprep.subr.bf16.mxu0 0
  %69 = vmatpush1.bf16.msra.mxu0 0
  %70 = vmatprep.subr.bf16.mxu0 0
  %71 = vmatpush1.bf16.msra.mxu0 0
  %72 = vmatprep.subr.bf16.mxu0 0
  %73 = vmatpush1.bf16.msra.mxu0 0
  %74 = vmatprep.subr.bf16.mxu0 0
  %75 = vmatpush1.bf16.msra.mxu0 0
  %76 = vmatprep.subr.bf16.mxu0 0
  %77 = vmatpush1.bf16.msra.mxu0 0
  %78 = vmatprep.subr.bf16.mxu0 0
  %79 = vmatpush1.bf16.msra.mxu0 0
  %80 = vmatprep.subr.bf16.mxu0 0
  %81 = vmatpush1.bf16.msra.mxu0 0
  %82 = vmatprep.subr.bf16.mxu0 0
  %83 = vmatpush1.bf16.msra.mxu0 0
  %84 = vmatprep.subr.bf16.mxu0 0
  %85 = vmatpush1.bf16.msra.mxu0 0
  %86 = vmatprep.subr.bf16.mxu0 0
  %87 = vmatpush1.bf16.msra.mxu0 0
  %88 = vmatprep.mubr.bf16.mxu0 0
  %89 = vmatmul.mubr.bf16.gmra.mrb[0].mxu0 %v54
  %v90 = vpop.f32.mrb[0].mxu0
  %v91 = vadd.f32 %v38, %v90
  %v92 = vpop.f32.mrb[0].mxu0
  %v93 = vpop.f32.mrb[0].mxu0
  %v94 = vpop.f32.mrb[0].mxu0
  %95 = vdwg.mxu0
  %v96 = vmax.f32 %v91, 0.0
  %v97 = vpack.c.bf16 %v96, %v96
  %v98 = vld [vmem:[%s3] sm:$0xf]
  %v99 = vld [vmem:[%s3 + $0x4] sm:$0xf]
  %v100 = vld [vmem:[%s3 + $0x8] sm:$0xf]
  %v101 = vld [vmem:[%s3 + $0xc] sm:$0xf]
  %v102 = vld [vmem:[%s3 + $0x10] sm:$0xf]
  %v103 = vld [vmem:[%s3 + $0x14] sm:$0xf]
  %v104 = vld [vmem:[%s3 + $0x18] sm:$0xf]
  %v105 = vld [vmem:[%s3 + $0x1c] sm:$0xf]
  %v106 = vld [vmem:[%s4] sm:$0x1]
  %v108 = vlaneseq
  %v109 = vshrl.u32 %v108, 7
  %v110 = vsub.s32 0, %v109
  %v111 = vrot.slane %v106, %v110
  %v121 = vunpack.c.l.b16 %v98
  %v122 = vunpack.c.l.b16 %v99
  %v123 = vunpack.c.l.b16 %v100
  %v124 = vunpack.c.l.b16 %v101
  %v125 = vunpack.c.l.b16 %v102
  %v126 = vunpack.c.l.b16 %v103
  %v127 = vunpack.c.l.b16 %v104
  %v128 = vunpack.c.l.b16 %v105
  %v129 = vpack.c.b16 %v122, %v121
  %v130 = vpack.c.b16 %v124, %v123
  %v131 = vpack.c.b16 %v126, %v125
  %v132 = vpack.c.b16 %v128, %v127
  %vm137 = vcmask 523264
  %v139 = vsel %vm137, %v97, 0
  %141 = vmatprep.subr.bf16.mxu0 0
  %142 = vmatpush1.bf16.msra.mxu0 %v129
  %143 = vmatprep.subr.bf16.mxu0 0
  %144 = vmatpush1.bf16.msra.mxu0 %v130
  %145 = vmatprep.subr.bf16.mxu0 0
  %146 = vmatpush1.bf16.msra.mxu0 %v131
  %147 = vmatprep.subr.bf16.mxu0 0
  %148 = vmatpush1.bf16.msra.mxu0 %v132
  %149 = vmatprep.subr.bf16.mxu0 0
  %150 = vmatpush1.bf16.msra.mxu0 0
  %151 = vmatprep.subr.bf16.mxu0 0
  %152 = vmatpush1.bf16.msra.mxu0 0
  %153 = vmatprep.subr.bf16.mxu0 0
  %154 = vmatpush1.bf16.msra.mxu0 0
  %155 = vmatprep.subr.bf16.mxu0 0
  %156 = vmatpush1.bf16.msra.mxu0 0
  %157 = vmatprep.subr.bf16.mxu0 0
  %158 = vmatpush1.bf16.msra.mxu0 0
  %159 = vmatprep.subr.bf16.mxu0 0
  %160 = vmatpush1.bf16.msra.mxu0 0
  %161 = vmatprep.subr.bf16.mxu0 0
  %162 = vmatpush1.bf16.msra.mxu0 0
  %163 = vmatprep.subr.bf16.mxu0 0
  %164 = vmatpush1.bf16.msra.mxu0 0
  %165 = vmatprep.subr.bf16.mxu0 0
  %166 = vmatpush1.bf16.msra.mxu0 0
  %167 = vmatprep.subr.bf16.mxu0 0
  %168 = vmatpush1.bf16.msra.mxu0 0
  %169 = vmatprep.subr.bf16.mxu0 0
  %170 = vmatpush1.bf16.msra.mxu0 0
  %171 = vmatprep.subr.bf16.mxu0 0
  %172 = vmatpush1.bf16.msra.mxu0 0
  %173 = vmatprep.mubr.bf16.mxu0 0
  %174 = vmatmul.mubr.bf16.gmra.mrb[0].mxu0 %v139
  %v175 = vpop.f32.mrb[0].mxu0
  %v176 = vadd.f32 %v111, %v175
  %v177 = vpop.f32.mrb[0].mxu0
  %v178 = vpop.f32.mrb[0].mxu0
  %v179 = vpop.f32.mrb[0].mxu0
  %180 = vdwg.mxu0
  %v181 = vmax.f32 %v176, 0.0
  %v182 = vpack.c.bf16 %v181, %v181
  %v183 = vld [vmem:[%s5] sm:$0xf]
  %v184 = vld [vmem:[%s5 + $0x4] sm:$0xf]
  %v185 = vld [vmem:[%s5 + $0x8] sm:$0xf]
  %v186 = vld [vmem:[%s5 + $0xc] sm:$0xf]
  %v187 = vld [vmem:[%s6] sm:$0x1]
  %v189 = vlaneseq
  %v190 = vshrl.u32 %v189, 7
  %v191 = vsub.s32 0, %v190
  %v192 = vrot.slane %v187, %v191
  %v198 = vunpack.c.l.b16 %v183
  %v199 = vunpack.c.l.b16 %v184
  %v200 = vunpack.c.l.b16 %v185
  %v201 = vunpack.c.l.b16 %v186
  %v202 = vpack.c.b16 %v199, %v198
  %v203 = vpack.c.b16 %v201, %v200
  %v207 = vsel %vm52, %v182, 0
  %209 = vmatprep.subr.bf16.mxu0 0
  %210 = vmatpush1.bf16.msra.mxu0 %v202
  %211 = vmatprep.subr.bf16.mxu0 0
  %212 = vmatpush1.bf16.msra.mxu0 %v203
  %213 = vmatprep.subr.bf16.mxu0 0
  %214 = vmatpush1.bf16.msra.mxu0 0
  %215 = vmatprep.subr.bf16.mxu0 0
  %216 = vmatpush1.bf16.msra.mxu0 0
  %217 = vmatprep.subr.bf16.mxu0 0
  %218 = vmatpush1.bf16.msra.mxu0 0
  %219 = vmatprep.subr.bf16.mxu0 0
  %220 = vmatpush1.bf16.msra.mxu0 0
  %221 = vmatprep.subr.bf16.mxu0 0
  %222 = vmatpush1.bf16.msra.mxu0 0
  %223 = vmatprep.subr.bf16.mxu0 0
  %224 = vmatpush1.bf16.msra.mxu0 0
  %225 = vmatprep.subr.bf16.mxu0 0
  %226 = vmatpush1.bf16.msra.mxu0 0
  %227 = vmatprep.subr.bf16.mxu0 0
  %228 = vmatpush1.bf16.msra.mxu0 0
  %229 = vmatprep.subr.bf16.mxu0 0
  %230 = vmatpush1.bf16.msra.mxu0 0
  %231 = vmatprep.subr.bf16.mxu0 0
  %232 = vmatpush1.bf16.msra.mxu0 0
  %233 = vmatprep.subr.bf16.mxu0 0
  %234 = vmatpush1.bf16.msra.mxu0 0
  %235 = vmatprep.subr.bf16.mxu0 0
  %236 = vmatpush1.bf16.msra.mxu0 0
  %237 = vmatprep.subr.bf16.mxu0 0
  %238 = vmatpush1.bf16.msra.mxu0 0
  %239 = vmatprep.subr.bf16.mxu0 0
  %240 = vmatpush1.bf16.msra.mxu0 0
  %241 = vmatprep.mubr.bf16.mxu0 0
  %242 = vmatmul.mubr.bf16.gmra.mrb[0].mxu0 %v207
  %v243 = vpop.f32.mrb[0].mxu0
  %v244 = vadd.f32 %v192, %v243
  %v245 = vpop.f32.mrb[0].mxu0
  %v246 = vpop.f32.mrb[0].mxu0
  %v247 = vpop.f32.mrb[0].mxu0
  %248 = vdwg.mxu0
  %vm249 = vcmask 31744
  %250 = vst.msk [vmem:[%s7] sm:$0xff] %vm249, %v244
  // Predicated region
  $region30: #{tpu_custom_call.1} parent=0 // pred_check
    _
  $region31: #{tpu_custom_call.1} parent=0 // pred_check_branch
    %252 = sbr.rel (0) target = $region33
  $region32: #{tpu_custom_call.1} parent=0 // pred_region
    _
  $region33: #{tpu_custom_call.1} parent=0 // pred_fallthru
    _
  // Predicated region
  $region34: #{tpu_custom_call.1} parent=0 // pred_check
    _
  $region35: #{tpu_custom_call.1} parent=0 // pred_check_branch
    %254 = sbr.rel (0) target = $region37
  $region36: #{tpu_custom_call.1} parent=0 // pred_region
    _
  $region37: #{tpu_custom_call.1} parent=0 // pred_fallthru
    _

</llo_original>
